<compile_context>
chip_gen: v7x
topology: tpu7x:2x2x1
jax: 0.10.0
libtpu: 0.0.40
codegen_flags: <defaults>
</compile_context>

<pallas_src>
import functools

import jax
import jax.numpy as jnp
from jax.experimental import pallas as pl
from jax.experimental.pallas import tpu as pltpu

GAMMA = 2.0           # module default gamma=2 -> (1-pt)**2 is a single VPU mul
IGNORE_INDEX = -100   # torch CE default; masked to zero contribution


def _round_up(x, m):
    return ((x + m - 1) // m) * m


def _focal_loss_kernel(logits_ref, target_ref, out_ref, acc_ref, *,
                       batch, tiles_per_split, n_classes, class_weights):
    """One (n_classes, tb) batch tile of focal loss, accumulated over grid axis 1.

    logits_ref : (N, tb)   class-major, batch samples on the 128-wide lane axis
    target_ref : (1, tb)   integer targets
    out_ref    : (1, 1, 1) per-split partial sum, written once at the last step
    acc_ref    : (1, 1)    f32 scalar accumulator, persistent across grid steps
    """
    c = pl.program_id(0)
    i = pl.program_id(1)

    @pl.when(i == 0)
    def _init():
        acc_ref[...] = jnp.zeros_like(acc_ref)

    x = logits_ref[...].astype(jnp.float32)              # (N, tb)
    tgt = target_ref[...].astype(jnp.int32)              # (1, tb)
    tb = x.shape[1]

    # Global sample index of every lane: masks the ragged last tile, overshoot
    # (clamped) grid steps, and ignore_index targets in one select.
    col0 = (c * tiles_per_split + i) * tb
    col = col0 + jax.lax.broadcasted_iota(jnp.int32, (1, tb), 1)
    valid = (col < batch) & (tgt >= 0) & (tgt < n_classes)

    # Numerically-stable softmax pieces over the class (sublane) axis.
    m = jnp.max(x, axis=0, keepdims=True)                # (1, tb)
    e = jnp.exp(x - m)                                   # (N, tb) -- only exps
    sumexp = jnp.sum(e, axis=0, keepdims=True)           # (1, tb)
    lse = m + jnp.log(sumexp)                            # (1, tb)

    # Gather logit / exp at the target class with a one-hot over N class rows.
    cls = jax.lax.broadcasted_iota(jnp.int32, x.shape, 0)
    onehot = (cls == tgt).astype(jnp.float32)            # (N, tb)
    x_y = jnp.sum(onehot * x, axis=0, keepdims=True)     # (1, tb)
    e_y = jnp.sum(onehot * e, axis=0, keepdims=True)     # (1, tb)

    # Per-sample class weight: statically [0.5, 1, 1, 1] -> one compare+select,
    # no weight DMA stream.
    w_y = jnp.ones_like(x_y)
    for k, wk in enumerate(class_weights):
        if wk != 1.0:
            w_y = jnp.where(tgt == k, jnp.float32(wk), w_y)

    nll = lse - x_y                                      # -log p_y  (>= 0)
    minus_logpt = w_y * nll                              # CE(weight, 'none')

    # pt = exp(-minus_logpt) = p_y ** w_y, without a second EUP exp:
    p_y = e_y * pl.reciprocal(sumexp, approx=False)      # approx=True ok in prod
    if all(wk in (0.5, 1.0) for wk in class_weights):
        pt = p_y
        half = None
        for k, wk in enumerate(class_weights):
            if wk == 0.5:
                is_k = tgt == k
                half = is_k if half is None else (half | is_k)
        if half is not None:
            pt = jnp.where(half, jnp.sqrt(p_y), pt)
    else:
        pt = jnp.exp(-minus_logpt)                       # generic fallback

    one_minus_pt = 1.0 - pt
    focal = one_minus_pt * one_minus_pt * minus_logpt    # gamma == 2 statically
    focal = jnp.where(valid, focal, 0.0)                 # also drops NaN garbage

    acc_ref[...] += jnp.sum(focal, axis=-1, keepdims=True)

    @pl.when(i == pl.num_programs(1) - 1)
    def _finalize():
        out_ref[...] = acc_ref[...].reshape(out_ref.shape)


def focal_loss_class_major(logits_nb, target,
                           class_weights=(0.5, 1.0, 1.0, 1.0), *,
                           tb_max=64 * 1024, splits=1, input_buffers=2):
    """Focal loss from class-major logits (the no-relayout production path).

    logits_nb : (N, B) float32 or bfloat16 -- classes on sublanes, batch on lanes
    target    : (B,) integer class ids (or ignore_index)
    Returns the scalar mean focal loss (denominator = B, as in the module).
    """
    n_cls, B = logits_nb.shape
    class_weights = tuple(float(w) for w in class_weights)
    assert len(class_weights) == n_cls

    if not jnp.issubdtype(target.dtype, jnp.integer):
        target = target.astype(jnp.int32)
    tgt2d = target.reshape(1, B)

    # Lane tile: multiple of 128 (or the full batch).  <=64K lanes keeps the
    # double-buffered input blocks ~8 MiB -> fits v5e's scoped-VMEM default and
    # v7x's 64 MiB/TC with headroom.
    tb = min(tb_max, _round_up(B, 128))
    if tb >= B:
        tb = B                        # single full-width block, no partial tile
    nt_total = pl.cdiv(B, tb)         # tiles needed to cover the batch (no pad)
    splits = max(1, min(splits, nt_total))
    nt = pl.cdiv(nt_total, splits)    # tiles per split (overshoot is masked)

    def tile_idx(c, i):
        # Clamp overshoot steps onto the last valid tile: that block is re-read
        # but contributes nothing (global-column mask in the kernel), and no
        # DMA ever starts outside the array.
        return jnp.minimum(c * nt + i, nt_total - 1)

    def in_spec(shape):
        kw = {}
        if input_buffers != 2:        # e.g. pl.Buffered(3) on v5e if DMA exposed
            kw["pipeline_mode"] = pl.Buffered(input_buffers)
        return pl.BlockSpec(shape, lambda c, i: (0, tile_idx(c, i)), **kw)

    kernel = functools.partial(
        _focal_loss_kernel, batch=B, tiles_per_split=nt,
        n_classes=n_cls, class_weights=class_weights)

    if splits > 1:                    # v7x: one half of the batch per TensorCore
        dims = (pltpu.CORE_PARALLEL, pltpu.ARBITRARY)
    else:                             # v5e / v6e: single TC, plain reduction
        dims = ("parallel", "arbitrary")

    out = pl.pallas_call(
        kernel,
        out_shape=jax.ShapeDtypeStruct((splits, 1, 1), jnp.float32),
        grid_spec=pltpu.PrefetchScalarGridSpec(
            num_scalar_prefetch=0,
            grid=(splits, nt),
            in_specs=[in_spec((n_cls, tb)), in_spec((1, tb))],
            out_specs=pl.BlockSpec((1, 1, 1), lambda c, i: (c, 0, 0)),
            scratch_shapes=[pltpu.VMEM((1, 1), jnp.float32)],
        ),
        compiler_params=pltpu.CompilerParams(
            dimension_semantics=dims,
            vmem_limit_bytes=32 * 1024 * 1024),
    )(logits_nb, tgt2d)

    # reduction='mean' over all B samples (ignored targets contribute 0 but are
    # counted in the denominator -- same as CE(reduction='none') then .mean()).
    return jnp.sum(out) / B


def focal_loss(logits, target, class_weights=(0.5, 1.0, 1.0, 1.0), **kwargs):
    """Module-facing API: logits (B, N), target (B,).

    Production note: feed `focal_loss_class_major` directly with (N, B) logits
    emitted by the producing matmul to skip this transpose's HBM round trip.
    """
    return focal_loss_class_major(jnp.transpose(logits), target,
                                  class_weights, **kwargs)


if __name__ == "__main__":
    key = jax.random.PRNGKey(0)
    k1, k2 = jax.random.split(key)
    B, N = 8, 4
    class_weights = (0.5, 1.0, 1.0, 1.0)

    logits = jax.random.normal(k1, (B, N), dtype=jnp.float32)
    target = jax.random.randint(k2, (B,), 0, N, dtype=jnp.int32)

    def ref_loss(lg_bn, tg):
        lg_bn = lg_bn.astype(jnp.float32)
        logp = jax.nn.log_softmax(lg_bn, axis=-1)
        nll = -jnp.take_along_axis(logp, tg[:, None], axis=-1)[:, 0]
        w_y = jnp.asarray(class_weights, jnp.float32)[tg]
        minus_logpt = w_y * nll
        pt = jnp.exp(-minus_logpt)
        return jnp.mean((1.0 - pt) ** 2 * minus_logpt)

    # 1) module API: (B, N) float32 logits
    loss = focal_loss(logits, target, class_weights)
    jax.block_until_ready(loss)
    ref = ref_loss(logits, target)
    assert jnp.allclose(loss, ref, rtol=1e-5, atol=1e-6), (loss, ref)

    # 2) production path: class-major (N, B) bf16 logits straight into the
    #    kernel (no transpose / pad materialization before the pallas_call)
    logits_nb_bf16 = jnp.transpose(logits).astype(jnp.bfloat16)
    loss_bf16 = focal_loss_class_major(logits_nb_bf16, target, class_weights)
    jax.block_until_ready(loss_bf16)
    ref_bf16 = ref_loss(jnp.transpose(logits_nb_bf16), target)
    assert jnp.allclose(loss_bf16, ref_bf16, rtol=1e-5, atol=1e-6), (loss_bf16, ref_bf16)

    print("KERNEL_OK")
</pallas_src>

<mosaic_0001>
module attributes {stable_mosaic.version = 11 : i64} {
  func.func @_focal_loss_kernel(%arg0: i32, %arg1: i32, %arg2: memref<4x8xf32, #tpu.memory_space<vmem>>, %arg3: memref<1x8xi32, #tpu.memory_space<vmem>>, %arg4: memref<1x1x1xf32, #tpu.memory_space<vmem>>, %arg5: memref<1x1xf32, #tpu.memory_space<vmem>>) attributes {dimension_semantics = [#tpu.dimension_semantics<parallel>, #tpu.dimension_semantics<arbitrary>], iteration_bounds = array<i64: 1, 1>, scalar_prefetch = 0 : i64, scratch_operands = 1 : i64, tpu.core_type = #tpu.core_type<tc>, window_params = [{transform_indices = @transform_0, window_bounds = array<i64: 4, 8>}, {transform_indices = @transform_1, window_bounds = array<i64: 1, 8>}, {transform_indices = @transform_2, window_bounds = array<i64: 1, 1, 1>}]} {
    %c0_i32 = arith.constant 0 : i32
    %0 = arith.cmpi eq, %arg1, %c0_i32 : i32
    %1 = arith.extui %0 : i1 to i32
    %c0_i32_0 = arith.constant 0 : i32
    %2 = arith.cmpi ne, %1, %c0_i32_0 : i32
    scf.if %2 {
      %cst_22 = arith.constant 0.000000e+00 : f32
      %66 = vector.broadcast %cst_22 : f32 to vector<1x1xf32>
      %c0_23 = arith.constant 0 : index
      %c0_24 = arith.constant 0 : index
      %67 = vector.load %arg5[%c0_23, %c0_24] : memref<1x1xf32, #tpu.memory_space<vmem>>, vector<1x1xf32>
      tpu.vector_store %arg5[%c0_23, %c0_24], %66 {strides = array<i32>} : memref<1x1xf32, #tpu.memory_space<vmem>>, vector<1x1xf32>,
    } else {
    }
    %c0 = arith.constant 0 : index
    %c0_1 = arith.constant 0 : index
    %3 = vector.load %arg2[%c0, %c0_1] : memref<4x8xf32, #tpu.memory_space<vmem>>, vector<4x8xf32>
    %c0_2 = arith.constant 0 : index
    %c0_3 = arith.constant 0 : index
    %4 = vector.load %arg3[%c0_2, %c0_3] : memref<1x8xi32, #tpu.memory_space<vmem>>, vector<1x8xi32>
    %c1_i32 = arith.constant 1 : i32
    %5 = arith.muli %arg0, %c1_i32 : i32
    %6 = arith.addi %5, %arg1 : i32
    %c8_i32 = arith.constant 8 : i32
    %7 = arith.muli %6, %c8_i32 : i32
    %8 = tpu.iota {dimensions = array<i32: 1>} : vector<1x8xi32>
    %9 = vector.broadcast %7 : i32 to vector<1x8xi32>
    %10 = arith.addi %9, %8 : vector<1x8xi32>
    %c8_i32_4 = arith.constant 8 : i32
    %11 = vector.broadcast %c8_i32_4 : i32 to vector<1x8xi32>
    %12 = arith.cmpi slt, %10, %11 : vector<1x8xi32>
    %c0_i32_5 = arith.constant 0 : i32
    %13 = vector.broadcast %c0_i32_5 : i32 to vector<1x8xi32>
    %14 = arith.cmpi sge, %4, %13 : vector<1x8xi32>
    %15 = arith.andi %12, %14 : vector<1x8xi1>
    %c4_i32 = arith.constant 4 : i32
    %16 = vector.broadcast %c4_i32 : i32 to vector<1x8xi32>
    %17 = arith.cmpi slt, %4, %16 : vector<1x8xi32>
    %18 = arith.andi %15, %17 : vector<1x8xi1>
    %cst = arith.constant dense<0xFF800000> : vector<8xf32>
    %19 = vector.multi_reduction <maximumf>, %3, %cst [0] : vector<4x8xf32> to vector<8xf32>
    %20 = vector.shape_cast %19 : vector<8xf32> to vector<1x8xf32>
    %21 = vector.broadcast %20 : vector<1x8xf32> to vector<4x8xf32>
    %22 = arith.subf %3, %21 : vector<4x8xf32>
    %23 = math.exp %22 : vector<4x8xf32>
    %cst_6 = arith.constant dense<0.000000e+00> : vector<8xf32>
    %24 = vector.multi_reduction <add>, %23, %cst_6 [0] : vector<4x8xf32> to vector<8xf32>
    %25 = vector.shape_cast %24 : vector<8xf32> to vector<1x8xf32>
    %26 = math.log %25 : vector<1x8xf32>
    %27 = arith.addf %20, %26 : vector<1x8xf32>
    %28 = tpu.iota {dimensions = array<i32: 0>} : vector<4x8xi32>
    %29 = vector.broadcast %4 : vector<1x8xi32> to vector<4x8xi32>
    %30 = arith.cmpi eq, %28, %29 : vector<4x8xi32>
    %31 = arith.extui %30 : vector<4x8xi1> to vector<4x8xi32>
    %32 = arith.sitofp %31 : vector<4x8xi32> to vector<4x8xf32>
    %33 = arith.mulf %32, %3 : vector<4x8xf32>
    %cst_7 = arith.constant dense<0.000000e+00> : vector<8xf32>
    %34 = vector.multi_reduction <add>, %33, %cst_7 [0] : vector<4x8xf32> to vector<8xf32>
    %35 = vector.shape_cast %34 : vector<8xf32> to vector<1x8xf32>
    %36 = arith.mulf %32, %23 : vector<4x8xf32>
    %cst_8 = arith.constant dense<0.000000e+00> : vector<8xf32>
    %37 = vector.multi_reduction <add>, %36, %cst_8 [0] : vector<4x8xf32> to vector<8xf32>
    %38 = vector.shape_cast %37 : vector<8xf32> to vector<1x8xf32>
    %cst_9 = arith.constant 1.000000e+00 : f32
    %39 = vector.broadcast %cst_9 : f32 to vector<1x8xf32>
    %c0_i32_10 = arith.constant 0 : i32
    %40 = vector.broadcast %c0_i32_10 : i32 to vector<1x8xi32>
    %41 = arith.cmpi eq, %4, %40 : vector<1x8xi32>
    %cst_11 = arith.constant 5.000000e-01 : f32
    %42 = vector.broadcast %cst_11 : f32 to vector<1x8xf32>
    %43 = arith.select %41, %42, %39 : vector<1x8xi1>, vector<1x8xf32>
    %44 = arith.subf %27, %35 : vector<1x8xf32>
    %45 = arith.mulf %43, %44 : vector<1x8xf32>
    %46 = tpu.reciprocal %25 : vector<1x8xf32> -> vector<1x8xf32>
    %47 = arith.mulf %38, %46 : vector<1x8xf32>
    %c0_i32_12 = arith.constant 0 : i32
    %48 = vector.broadcast %c0_i32_12 : i32 to vector<1x8xi32>
    %49 = arith.cmpi eq, %4, %48 : vector<1x8xi32>
    %50 = math.sqrt %47 : vector<1x8xf32>
    %51 = arith.select %49, %50, %47 : vector<1x8xi1>, vector<1x8xf32>
    %cst_13 = arith.constant 1.000000e+00 : f32
    %52 = vector.broadcast %cst_13 : f32 to vector<1x8xf32>
    %53 = arith.subf %52, %51 : vector<1x8xf32>
    %54 = arith.mulf %53, %53 : vector<1x8xf32>
    %55 = arith.mulf %54, %45 : vector<1x8xf32>
    %cst_14 = arith.constant 0.000000e+00 : f32
    %56 = vector.broadcast %cst_14 : f32 to vector<1x8xf32>
    %57 = arith.select %18, %55, %56 : vector<1x8xi1>, vector<1x8xf32>
    %c0_15 = arith.constant 0 : index
    %c0_16 = arith.constant 0 : index
    %58 = vector.load %arg5[%c0_15, %c0_16] : memref<1x1xf32, #tpu.memory_space<vmem>>, vector<1x1xf32>
    %cst_17 = arith.constant dense<0.000000e+00> : vector<1xf32>
    %59 = vector.multi_reduction <add>, %57, %cst_17 [1] : vector<1x8xf32> to vector<1xf32>
    %60 = vector.shape_cast %59 : vector<1xf32> to vector<1x1xf32>
    %61 = arith.addf %58, %60 : vector<1x1xf32>
    %c0_18 = arith.constant 0 : index
    %c0_19 = arith.constant 0 : index
    %62 = vector.load %arg5[%c0_18, %c0_19] : memref<1x1xf32, #tpu.memory_space<vmem>>, vector<1x1xf32>
    tpu.vector_store %arg5[%c0_18, %c0_19], %61 {strides = array<i32>} : memref<1x1xf32, #tpu.memory_space<vmem>>, vector<1x1xf32>,
    %c0_i32_20 = arith.constant 0 : i32
    %63 = arith.cmpi eq, %arg1, %c0_i32_20 : i32
    %64 = arith.extui %63 : i1 to i32
    %c0_i32_21 = arith.constant 0 : i32
    %65 = arith.cmpi ne, %64, %c0_i32_21 : i32
    scf.if %65 {
      %c0_22 = arith.constant 0 : index
      %c0_23 = arith.constant 0 : index
      %66 = vector.load %arg5[%c0_22, %c0_23] : memref<1x1xf32, #tpu.memory_space<vmem>>, vector<1x1xf32>
      %67 = vector.shape_cast %66 : vector<1x1xf32> to vector<1x1x1xf32>
      %c0_24 = arith.constant 0 : index
      %c0_25 = arith.constant 0 : index
      %c0_26 = arith.constant 0 : index
      %68 = vector.load %arg4[%c0_24, %c0_25, %c0_26] : memref<1x1x1xf32, #tpu.memory_space<vmem>>, vector<1x1x1xf32>
      tpu.vector_store %arg4[%c0_24, %c0_25, %c0_26], %67 {strides = array<i32>} : memref<1x1x1xf32, #tpu.memory_space<vmem>>, vector<1x1x1xf32>,
    } else {
    }
    return
  }
  func.func @transform_0(%arg0: i32, %arg1: i32) -> (i32, i32) {
    %c1_i32 = arith.constant 1 : i32
    %0 = arith.muli %arg0, %c1_i32 : i32
    %1 = arith.addi %0, %arg1 : i32
    %c0_i32 = arith.constant 0 : i32
    %2 = arith.minsi %1, %c0_i32 : i32
    %c0_i32_0 = arith.constant 0 : i32
    %c0_i32_1 = arith.constant 0 : i32
    return %c0_i32_0, %2 : i32, i32
  }
  func.func @transform_1(%arg0: i32, %arg1: i32) -> (i32, i32) {
    %c1_i32 = arith.constant 1 : i32
    %0 = arith.muli %arg0, %c1_i32 : i32
    %1 = arith.addi %0, %arg1 : i32
    %c0_i32 = arith.constant 0 : i32
    %2 = arith.minsi %1, %c0_i32 : i32
    %c0_i32_0 = arith.constant 0 : i32
    %c0_i32_1 = arith.constant 0 : i32
    return %c0_i32_0, %2 : i32, i32
  }
  func.func @transform_2(%arg0: i32, %arg1: i32) -> (i32, i32, i32) {
    %c0_i32 = arith.constant 0 : i32
    %c0_i32_0 = arith.constant 0 : i32
    %c0_i32_1 = arith.constant 0 : i32
    return %arg0, %c0_i32, %c0_i32_0 : i32, i32, i32
  }
}

</mosaic_0001>

<llo_original>
// kernel: tpu_custom_call.1
$region0: #{tpu_custom_call.1}
  #allocation0 [shape = 'u32[]', space=smem, size = 0x4, offset = 0x4, fixed_abs, tag = 'smem constant byte address 0x4 - core index']
  #allocation1 [shape = 'u32[144,128]{1,0:T(1,128)}', space=vmem, size = 0x12000, scoped, tag = 'internal scratch']
  #allocation2 [shape = 'f32[1,1]{1,0:T(1,128)}', space=vmem, size = 0x200, scoped, tag = 'scratch operand']
  %s0 = inlined_call_operand.hbm [shape: f32[4,8], index: 0, kind: input, shape index: {}]
  %s1 = inlined_call_operand.vmem [shape: s32[1,8], index: 1, kind: input, shape index: {}]
  %s2 = inlined_call_operand.hbm [shape: f32[1,1,1], index: 2, kind: output, shape index: {}]
  %s3 = sld [smem:[#allocation0]]
  $region30: #{tpu_custom_call.1} parent=0
    _
  %s5 = ssub.s32 1, %s3
  %s6 = scalar_select 0, %s5, %s3
  $region1: #{tpu_custom_call.1} parent=0
    #allocation3 [shape = 'u8[2048]{0}', space=vmem, size = 0x800, scoped, tag = 'input window, operand 0, single buffered']
    #allocation4 [shape = 's32[1]{0}', space=sflag, size = 0x4, scoped, tag = 'scoped memory for tpu_custom_call.1']
    #allocation5 [shape = 's32[1]{0}', space=sflag, size = 0x4, scoped, tag = 'scoped memory for tpu_custom_call.1']
    #allocation6 [shape = 'u8[512]{0}', space=vmem, size = 0x400, scoped, tag = 'output window, operand 0, single buffered']
    %7 = vsyncpa [#allocation4], 0
    %8 = vsyncpa [#allocation5], 0
    // Predicated region
    $region2: #{tpu_custom_call.1} parent=1 // pred_check
      _
    $region3: #{tpu_custom_call.1} parent=1 // pred_check_branch
      %10 = sbr.rel (0) target = $region5
    $region4: #{tpu_custom_call.1} parent=1 // pred_region
      %s11 = sadd.s32 0, 0
      %p12 = scmp.lt.s32.totalorder %s11, 0
      %s13 = scalar_select %p12, %s11, 0
      %s15 = ssub.s32 64, 64
      %16 = vsyncadd [#allocation4], %s15
      %s17 = smul.addr %s13, 64
      %s18 = scalar_lea.hbm %s0, %s17
      %s20 = sshll.u32 [#allocation3], 4
      %s21 = int_to_ptr.vmem [resolvable:$true] %s20
      %23 = dma.hbm_to_vmem [thread:$0]  %s18, 64, %s21, [#allocation4]
    $region5: #{tpu_custom_call.1} parent=1 // pred_fallthru
      _
    // Predicated region
    $region6: #{tpu_custom_call.1} parent=1 // pred_check
      _
    $region7: #{tpu_custom_call.1} parent=1 // pred_check_branch
      %25 = sbr.rel (0) target = $region9
    $region8: #{tpu_custom_call.1} parent=1 // pred_region
      %s26 = sadd.s32 0, 0
      %p27 = scmp.lt.s32.totalorder %s26, 0
      %s28 = scalar_select %p27, %s26, 0
      %p29 = scmp.lt.s32.totalorder %s28, 0
      %s30 = scalar_select %p29, %s28, 0
      %s31 = scalar_lea.vmem %s1, %s30
      %s32 = sadd.s32 0, 0
      %p33 = scmp.lt.s32.totalorder %s32, 0
      %s34 = scalar_select %p33, %s32, 0
    $region9: #{tpu_custom_call.1} parent=1 // pred_fallthru
      _
    // Predicated region
    $region10: #{tpu_custom_call.1} parent=1 // pred_check
      _
    $region11: #{tpu_custom_call.1} parent=1 // pred_check_branch
      %36 = sbr.rel (0) target = $region13
    $region12: #{tpu_custom_call.1} parent=1 // pred_region
      %37 = dma.done [#allocation4], 64
    $region13: #{tpu_custom_call.1} parent=1 // pred_fallthru
      _
    %s38 = sadd.s32 0, 0
    %p39 = scmp.lt.s32.totalorder %s38, 0
    %s40 = scalar_select %p39, %s38, 0
    %p41 = scmp.lt.s32.totalorder %s40, 0
    %s42 = scalar_select %p41, %s40, 0
    %s43 = scalar_lea.vmem %s1, %s42
    %s44 = sadd.s32 0, 0
    %p45 = scmp.lt.s32.totalorder %s44, 0
    %s46 = scalar_select %p45, %s44, 0
    %s47 = sadd.s32 0, 0
    %p48 = scmp.lt.s32.totalorder %s47, 0
    %s49 = scalar_select %p48, %s47, 0
    %p50 = scmp.lt.s32.totalorder %s49, 0
    %s51 = scalar_select %p50, %s49, 0
    %s52 = scalar_lea.vmem %s1, %s51
    %s53 = sadd.s32 0, 0
    %p54 = scmp.lt.s32.totalorder %s53, 0
    %s55 = scalar_select %p54, %s53, 0
    %p56 = scmp.eq.s32.totalorder 0, 0
    // Predicated region
    $region14: #{tpu_custom_call.1} parent=1 // pred_check
      %p57 = pneg %p56
    $region15: #{tpu_custom_call.1} parent=1 // pred_check_branch
      %59 = sbr.rel (%p57) target = $region17
    $region16: #{tpu_custom_call.1} parent=1 // pred_region
      %vm60 = vcmask 0
      %61 = vst.msk [vmem:[#allocation2] sm:$0x1] %vm60, 0.0
    $region17: #{tpu_custom_call.1} parent=1 // pred_fallthru
      _
    %v62 = vld [vmem:[#allocation3] sm:$0xf]
    %v63 = vld [vmem:[%s52] sm:$0x1]
    %s64 = sadd.s32 0, 0
    %s65 = smul.u32 %s64, 8
    %v66 = vlaneseq
    %v67 = vand.u32 %v66, 127
    %v68 = vstv %s65
    %v69 = vadd.s32 %v68, %v67
    %vm70 = vcmp.lt.s32.totalorder %v69, 8
    %vm71 = vcmp.ge.s32.totalorder %v63, 0
    %vm72 = vmand %vm70, %vm71
    %vm73 = vcmp.lt.s32.totalorder %v63, 4
    %vm74 = vmand %vm72, %vm73
    %vm75 = vcmask 60416
    %v76 = vsel %vm75, %v62, -inf
    %v77 = vrot.slane %v76, 4
    %v78 = vmax.f32 %v76, %v77
    %v79 = vrot.slane %v78, 2
    %v80 = vmax.f32 %v78, %v79
    %v81 = vrot.slane %v80, 1
    %v82 = vmax.f32 %v80, %v81
    %v83 = vsub.f32 %v62, %v82
    %v84 = vmul.f32 %v83, 1.442695
    %v85 = vpow.pop %v84
    %v86 = vsel %vm75, %v85, 0.0
    %v87 = vrot.slane %v86, 4
    %v88 = vadd.f32 %v86, %v87
    %v89 = vrot.slane %v88, 2
    %v90 = vadd.f32 %v88, %v89
    %v91 = vrot.slane %v90, 1
    %v92 = vadd.f32 %v90, %v91
    %v93 = vlog2.pop %v92
    %v94 = vmul.f32 %v93, 0.6931472
    %v95 = vadd.f32 %v82, %v94
    %v96 = vlaneseq
    %v97 = vshrl.u32 %v96, 7
    %v98 = vlaneseq
    %v99 = vshrl.u32 %v98, 7
    %v100 = vsub.s32 0, %v99
    %v101 = vrot.slane %v63, %v100
    %vm102 = vcmp.eq.s32.totalorder %v97, %v101
    %v103 = vsel %vm102, 1, 0
    %v104 = vcvt.s32.f32 %v103
    %v105 = vmul.f32 %v104, %v62
    %v106 = vsel %vm75, %v105, 0.0
    %v107 = vrot.slane %v106, 4
    %v108 = vadd.f32 %v106, %v107
    %v109 = vrot.slane %v108, 2
    %v110 = vadd.f32 %v108, %v109
    %v111 = vrot.slane %v110, 1
    %v112 = vadd.f32 %v110, %v111
    %v113 = vmul.f32 %v104, %v85
    %v114 = vsel %vm75, %v113, 0.0
    %v115 = vrot.slane %v114, 4
    %v116 = vadd.f32 %v114, %v115
    %v117 = vrot.slane %v116, 2
    %v118 = vadd.f32 %v116, %v117
    %v119 = vrot.slane %v118, 1
    %v120 = vadd.f32 %v118, %v119
    %vm121 = vcmp.eq.s32.totalorder %v63, 0
    %v122 = vsel %vm121, 0.5, 1.0
    %v123 = vsub.f32 %v95, %v112
    %v124 = vmul.f32 %v122, %v123
    %v125 = vrcp.pop %v92
    %v126 = vmul.f32 %v120, %v125
    %v127 = vrsqrt.pop %v126
    %v128 = vmul.f32 %v126, %v127
    %vm129 = vcmp.eq.f32.partialorder %v126, inf
    %v130 = vsel %vm129, %v126, %v128
    %vm131 = vcmp.eq.f32.partialorder %v126, 0.0
    %v132 = vand.u32 %v126, 2147483648
    %v133 = vsel %vm131, %v132, %v130
    %v134 = vsel %vm121, %v133, %v126
    %v135 = vsub.f32 1.0, %v134
    %v136 = vmul.f32 %v135, %v135
    %v137 = vmul.f32 %v136, %v124
    %v138 = vsel %vm74, %v137, 0.0
    %v139 = vld [vmem:[#allocation2] sm:$0x1]
    %vm140 = vcmask 57344
    %v141 = vsel %vm140, %v138, 0.0
    %142 = vadd.xlane.f32.xlu0 %v141
    %v143 = vpop.xlane.xlu0 %142
    %v144 = vadd.f32 %v139, %v143
    %vm145 = vcmask 0
    %146 = vst.msk [vmem:[#allocation2] sm:$0x1] %vm145, %v144
    // Predicated region
    $region18: #{tpu_custom_call.1} parent=1 // pred_check
      %p147 = pneg %p56
    $region19: #{tpu_custom_call.1} parent=1 // pred_check_branch
      %149 = sbr.rel (%p147) target = $region21
    $region20: #{tpu_custom_call.1} parent=1 // pred_region
      %v150 = vld [vmem:[#allocation2] sm:$0x1]
      %151 = vst.msk [vmem:[#allocation6] sm:$0x1] %vm145, %v150
    $region21: #{tpu_custom_call.1} parent=1 // pred_fallthru
      _
    // Predicated region
    $region22: #{tpu_custom_call.1} parent=1 // pred_check
      _
    $region23: #{tpu_custom_call.1} parent=1 // pred_check_branch
      %153 = sbr.rel (0) target = $region25
    $region24: #{tpu_custom_call.1} parent=1 // pred_region
      %s155 = ssub.s32 16, 16
      %156 = vsyncadd [#allocation5], %s155
      %s158 = sshll.u32 [#allocation6], 4
      %s159 = int_to_ptr.vmem [resolvable:$true] %s158
      %161 = dma.vmem_to_hbm [thread:$0]  %s159, 16, %s2, [#allocation5]
    $region25: #{tpu_custom_call.1} parent=1 // pred_fallthru
      _
    // Predicated region
    $region26: #{tpu_custom_call.1} parent=1 // pred_check
      _
    $region27: #{tpu_custom_call.1} parent=1 // pred_check_branch
      %163 = sbr.rel (0) target = $region29
    $region28: #{tpu_custom_call.1} parent=1 // pred_region
      %164 = dma.done [#allocation5], 16
    $region29: #{tpu_custom_call.1} parent=1 // pred_fallthru
      _
    %165 = vsyncpa [#allocation4], 1
    %166 = vsyncpa [#allocation5], 1

</llo_original>
